<compile_context>
chip_gen: v6e
topology: v6e:2x2x1
jax: 0.10.0
libtpu: 0.0.40
codegen_flags: <defaults>
</compile_context>

<pallas_src>
import jax
import jax.numpy as jnp
from jax.experimental import pallas as pl
from jax.experimental.pallas import tpu as pltpu


def down_trans_kernel(p_ref, w_ref, bias_ref, alpha_ref, o_ref):
    # p_ref:   (1, K, tP)  bf16 space-to-depth input patches
    # w_ref:   (Cout, K)   bf16 conv weight with BN scale folded in (VMEM-resident)
    # bias/alpha: (Cout,1) f32 folded-BN bias, PReLU slope (VMEM-resident)
    patches = p_ref[0]                                   # (K, tP)
    w = w_ref[...]                                       # (Cout, K)

    # Conv3d(k=2,s=2,bias=False) * BN-scale == one MXU matmul, f32 accumulation.
    y = jnp.dot(w, patches, preferred_element_type=jnp.float32)   # (Cout, tP) f32

    # Folded BN shift + per-channel PReLU, in f32.
    y = y + bias_ref[...]
    y = jnp.where(y >= 0.0, y, alpha_ref[...] * y)

    o_ref[0] = y.astype(o_ref.dtype)


def down_trans_forward(x, conv_w, gamma, beta, running_mean, running_var,
                       prelu_alpha, *, eps=1e-5, drop_rate=0.0,
                       compute_dtype=jnp.bfloat16,
                       target_step_bytes=2 * 1024 * 1024):
    """Forward pass of DownTrans: PReLU(BN(Conv3d_k2s2(x))), eval-mode BN."""
    assert drop_rate == 0.0  # TODO(synk): dropout not implemented (inference path)
    n, cin, d, h, w = x.shape
    cout = conv_w.shape[0]
    assert d % 2 == 0 and h % 2 == 0 and w % 2 == 0
    do, ho, wo = d // 2, h // 2, w // 2
    P = do * ho * wo
    K = cin * 8   # bf16 sublane packing is cleanest when Cin is even (K % 16 == 0)

    # Cast to bf16 BEFORE space-to-depth so the transpose traffic and the kernel
    # stream are both half-width.  (N,Cin,D,H,W) -> (N, K, P), K ordered
    # (ci,kd,kh,kw) to match the weight reshape, P ordered (do,ho,wo).
    xc = x.astype(compute_dtype)
    patches = xc.reshape(n, cin, do, 2, ho, 2, wo, 2)
    patches = patches.transpose(0, 1, 3, 5, 7, 2, 4, 6).reshape(n, K, P)

    # Fold inference BatchNorm: scale into the (tiny) conv weight, shift into a
    # per-channel bias.  PReLU slope stays per-channel.
    scale = gamma.astype(jnp.float32) / jnp.sqrt(running_var.astype(jnp.float32) + eps)
    bias = (beta.astype(jnp.float32) - running_mean.astype(jnp.float32) * scale)
    bias = bias.reshape(cout, 1)
    alpha = prelu_alpha.astype(jnp.float32).reshape(cout, 1)
    w2d = (conv_w.reshape(cout, K).astype(jnp.float32) * scale[:, None])
    w2d = w2d.astype(compute_dtype)

    # ---- lane-axis tiling: multiple of 128, sized by streamed bytes per step ----
    itemsize = jnp.dtype(compute_dtype).itemsize
    lanes_for_target = target_step_bytes // max(K * itemsize, 1)
    tP = max(512, min(8192, int(lanes_for_target)))
    tP = (tP // 128) * 128
    p_pad_min = pl.cdiv(P, 128) * 128          # lane axis always padded to 128
    tP = min(tP, p_pad_min)
    # Nudge total grid-step count to be even so both v7x TensorCores get work.
    while (n * pl.cdiv(p_pad_min, tP)) % 2 != 0 and tP > 128:
        tP -= 128
    p_pad = pl.cdiv(P, tP) * tP
    if p_pad != P:
        patches = jnp.pad(patches, ((0, 0), (0, 0), (0, p_pad - P)))

    out = pl.pallas_call(
        down_trans_kernel,
        out_shape=jax.ShapeDtypeStruct((n, cout, p_pad), x.dtype),
        grid_spec=pltpu.PrefetchScalarGridSpec(
            num_scalar_prefetch=0,
            grid=(n, p_pad // tP),
            in_specs=[
                pl.BlockSpec((1, K, tP), lambda i, s: (i, 0, s)),
                pl.BlockSpec((cout, K), lambda i, s: (0, 0)),
                pl.BlockSpec((cout, 1), lambda i, s: (0, 0)),
                pl.BlockSpec((cout, 1), lambda i, s: (0, 0)),
            ],
            out_specs=pl.BlockSpec((1, cout, tP), lambda i, s: (i, 0, s)),
        ),
        compiler_params=pltpu.CompilerParams(
            dimension_semantics=("parallel", "parallel"),
            # Generation-safe: v7x has 64 MiB VMEM/TC (32 MiB scoped default);
            # our double-buffered blocks need only a few MiB.
            vmem_limit_bytes=32 * 1024 * 1024),
    )(patches, w2d, bias, alpha)

    out = out[:, :, :P].reshape(n, cout, do, ho, wo)
    return out


def down_trans_reference(x, conv_w, gamma, beta, running_mean, running_var,
                         prelu_alpha, eps=1e-5):
    # Independent pure-JAX f32 reference of the PyTorch forward (eval-mode BN).
    y = jax.lax.conv_general_dilated(
        x, conv_w, window_strides=(2, 2, 2), padding="VALID",
        dimension_numbers=("NCDHW", "OIDHW", "NCDHW"))
    b = lambda v: v[None, :, None, None, None]
    y = (y - b(running_mean)) / jnp.sqrt(b(running_var) + eps) * b(gamma) + b(beta)
    y = jnp.where(y >= 0.0, y, b(prelu_alpha) * y)
    return y


if __name__ == "__main__":
    key = jax.random.PRNGKey(0)
    k1, k2, k3, k4, k5, k6 = jax.random.split(key, 6)

    # Small shapes consistent with the module: N=2, Cin=4 -> Cout=8, 8^3 volume.
    N, Cin, Cout, D, H, W = 2, 4, 8, 8, 8, 8

    x = jax.random.normal(k1, (N, Cin, D, H, W), dtype=jnp.float32)
    conv_w = 0.1 * jax.random.normal(k2, (Cout, Cin, 2, 2, 2), dtype=jnp.float32)
    gamma = 1.0 + 0.1 * jax.random.normal(k3, (Cout,), dtype=jnp.float32)
    beta = 0.1 * jax.random.normal(k4, (Cout,), dtype=jnp.float32)
    running_mean = 0.1 * jax.random.normal(k5, (Cout,), dtype=jnp.float32)
    running_var = jnp.abs(1.0 + 0.1 * jax.random.normal(k6, (Cout,), dtype=jnp.float32))
    prelu_alpha = jnp.full((Cout,), 0.25, dtype=jnp.float32)   # PReLU default init

    fwd = jax.jit(down_trans_forward)   # lets XLA fuse cast + space-to-depth + pad
    out = fwd(x, conv_w, gamma, beta, running_mean, running_var, prelu_alpha)
    jax.block_until_ready(out)

    ref = down_trans_reference(x, conv_w, gamma, beta, running_mean, running_var,
                               prelu_alpha)
    assert out.shape == (N, Cout, D // 2, H // 2, W // 2)
    # bf16 streamed data (f32 accumulation) -> loosened tolerance vs the f32 ref.
    assert jnp.allclose(out, ref, atol=3e-2, rtol=3e-2), \
        float(jnp.max(jnp.abs(out - ref)))
    print("KERNEL_OK")
</pallas_src>

<mosaic_0001>
module attributes {stable_mosaic.version = 11 : i64} {
  func.func @down_trans_kernel(%arg0: i32, %arg1: i32, %arg2: memref<1x32x128xbf16, #tpu.memory_space<vmem>>, %arg3: memref<8x32xbf16, #tpu.memory_space<vmem>>, %arg4: memref<8x1xf32, #tpu.memory_space<vmem>>, %arg5: memref<8x1xf32, #tpu.memory_space<vmem>>, %arg6: memref<1x8x128xf32, #tpu.memory_space<vmem>>) attributes {dimension_semantics = [#tpu.dimension_semantics<parallel>, #tpu.dimension_semantics<parallel>], iteration_bounds = array<i64: 2, 1>, scalar_prefetch = 0 : i64, scratch_operands = 0 : i64, tpu.core_type = #tpu.core_type<tc>, window_params = [{transform_indices = @transform_0, window_bounds = array<i64: 1, 32, 128>}, {pipeline_mode = #tpu.pipeline_mode<synchronous>, transform_indices = @transform_1, window_bounds = array<i64: 8, 32>}, {pipeline_mode = #tpu.pipeline_mode<synchronous>, transform_indices = @transform_2, window_bounds = array<i64: 8, 1>}, {pipeline_mode = #tpu.pipeline_mode<synchronous>, transform_indices = @transform_3, window_bounds = array<i64: 8, 1>}, {transform_indices = @transform_4, window_bounds = array<i64: 1, 8, 128>}]} {
    %c0 = arith.constant 0 : index
    %c0_0 = arith.constant 0 : index
    %c0_1 = arith.constant 0 : index
    %0 = vector.load %arg2[%c0, %c0_0, %c0_1] : memref<1x32x128xbf16, #tpu.memory_space<vmem>>, vector<1x32x128xbf16>
    %1 = vector.shape_cast %0 : vector<1x32x128xbf16> to vector<32x128xbf16>
    %c0_2 = arith.constant 0 : index
    %c0_3 = arith.constant 0 : index
    %2 = vector.load %arg3[%c0_2, %c0_3] : memref<8x32xbf16, #tpu.memory_space<vmem>>, vector<8x32xbf16>
    %cst = arith.constant dense<0.000000e+00> : vector<8x128xf32>
    %3 = tpu.matmul %2, %1, %cst {dimension_numbers = #tpu.dot_dimension_numbers<[1], [0], [0], [1], [0, 0, 1, 1], [], []>} : vector<8x32xbf16>, vector<32x128xbf16>, vector<8x128xf32> -> vector<8x128xf32>
    %c0_4 = arith.constant 0 : index
    %c0_5 = arith.constant 0 : index
    %4 = vector.load %arg4[%c0_4, %c0_5] : memref<8x1xf32, #tpu.memory_space<vmem>>, vector<8x1xf32>
    %5 = vector.broadcast %4 : vector<8x1xf32> to vector<8x128xf32>
    %6 = arith.addf %3, %5 : vector<8x128xf32>
    %cst_6 = arith.constant 0.000000e+00 : f32
    %7 = vector.broadcast %cst_6 : f32 to vector<8x128xf32>
    %8 = arith.cmpf oge, %6, %7 : vector<8x128xf32>
    %c0_7 = arith.constant 0 : index
    %c0_8 = arith.constant 0 : index
    %9 = vector.load %arg5[%c0_7, %c0_8] : memref<8x1xf32, #tpu.memory_space<vmem>>, vector<8x1xf32>
    %10 = vector.broadcast %9 : vector<8x1xf32> to vector<8x128xf32>
    %11 = arith.mulf %10, %6 : vector<8x128xf32>
    %12 = arith.select %8, %6, %11 : vector<8x128xi1>, vector<8x128xf32>
    %c0_9 = arith.constant 0 : index
    %c0_10 = arith.constant 0 : index
    %c0_11 = arith.constant 0 : index
    %13 = vector.load %arg6[%c0_9, %c0_10, %c0_11] : memref<1x8x128xf32, #tpu.memory_space<vmem>>, vector<1x8x128xf32>
    %14 = vector.shape_cast %13 : vector<1x8x128xf32> to vector<8x128xf32>
    %15 = vector.shape_cast %12 : vector<8x128xf32> to vector<1x8x128xf32>
    tpu.vector_store %arg6[%c0_9, %c0_10, %c0_11], %15 {strides = array<i32>} : memref<1x8x128xf32, #tpu.memory_space<vmem>>, vector<1x8x128xf32>,
    return
  }
  func.func @transform_0(%arg0: i32, %arg1: i32) -> (i32, i32, i32) {
    %c0_i32 = arith.constant 0 : i32
    %c0_i32_0 = arith.constant 0 : i32
    return %arg0, %c0_i32, %arg1 : i32, i32, i32
  }
  func.func @transform_1(%arg0: i32, %arg1: i32) -> (i32, i32) {
    %c0_i32 = arith.constant 0 : i32
    %c0_i32_0 = arith.constant 0 : i32
    %c0_i32_1 = arith.constant 0 : i32
    return %c0_i32, %c0_i32_0 : i32, i32
  }
  func.func @transform_2(%arg0: i32, %arg1: i32) -> (i32, i32) {
    %c0_i32 = arith.constant 0 : i32
    %c0_i32_0 = arith.constant 0 : i32
    %c0_i32_1 = arith.constant 0 : i32
    return %c0_i32, %c0_i32_0 : i32, i32
  }
  func.func @transform_3(%arg0: i32, %arg1: i32) -> (i32, i32) {
    %c0_i32 = arith.constant 0 : i32
    %c0_i32_0 = arith.constant 0 : i32
    %c0_i32_1 = arith.constant 0 : i32
    return %c0_i32, %c0_i32_0 : i32, i32
  }
  func.func @transform_4(%arg0: i32, %arg1: i32) -> (i32, i32, i32) {
    %c0_i32 = arith.constant 0 : i32
    %c0_i32_0 = arith.constant 0 : i32
    return %arg0, %c0_i32, %arg1 : i32, i32, i32
  }
}

</mosaic_0001>

<llo_original>
// kernel: down_trans_forward.1
$region0: #{down_trans_forward.1}
  #allocation0 [shape = 'u32[]', space=smem, size = 0x4, offset = 0x4, fixed_abs, tag = 'smem constant byte address 0x4 - core index']
  #allocation1 [shape = 'u32[144,128]{1,0:T(1,128)}', space=vmem, size = 0x12000, scoped, tag = 'internal scratch']
  %s0 = inlined_call_operand.vmem [shape: bf16[2,32,128], index: 0, kind: input, shape index: {}]
  %s1 = inlined_call_operand.vmem [shape: bf16[8,32], index: 1, kind: input, shape index: {}]
  %s2 = inlined_call_operand.vmem [shape: f32[8,1], index: 2, kind: input, shape index: {}]
  %s3 = inlined_call_operand.vmem [shape: f32[8,1], index: 3, kind: input, shape index: {}]
  %s4 = inlined_call_operand.vmem [shape: f32[2,8,128], index: 4, kind: output, shape index: {}]
  %s5 = sld [smem:[#allocation0]]
  $region49: #{down_trans_forward.1} parent=0
    _
  %s7 = ssub.s32 1, %s5
  %s8 = scalar_select 0, %s7, %s5
  loop: start=0, step=1, limit=4
  $region2: #{down_trans_forward.1} parent=0 // loop_pre_header
    _
  $region3: #{down_trans_forward.1} parent=0 // loop_header
    %s10 = sphi 0, %s14
    %p11 = scmp.ge.s32.totalorder %s10, 4
    %s17 = sphi 0, %s29
    %s18 = sphi 0, %s25
    %s19 = sphi 0, %s17
    %s20 = sphi 0, %s18
    %s21 = sphi 0, %s19
    %s22 = sphi 0, %s20
    %s34 = sphi 0, %s36
    %s37 = sphi 0, %s34
    %s38 = sphi 0, %s37
    %s54 = sphi 0, %s38
    %s58 = sphi 0, %s58
    %s60 = sphi 0, %s58
    %s61 = sphi 0, %s60
    %s75 = sphi 0, %s61
    %s79 = sphi 0, %s79
    %s81 = sphi 0, %s79
    %s82 = sphi 0, %s81
    %s96 = sphi 0, %s82
    %s100 = sphi 0, %s100
    %s102 = sphi 0, %s100
    %s103 = sphi 0, %s102
    %s117 = sphi 0, %s103
    %s125 = sphi 0, %s127
    %s128 = sphi 0, %s125
    %s129 = sphi 0, %s128
    %s145 = sphi 0, %s129
  $region4: #{down_trans_forward.1} parent=0 // loop_header_branch
    %13 = sbr.rel (%p11) target = $region8
  $region5: #{down_trans_forward.1} parent=0 // loop_body
    %s15 = ssub.s32 %s10, 1
    %s16 = ssub.s32 %s10, 2
    %s23 = sadd.s32 1, %s18
    %p24 = scmp.ge.s32.totalorder %s23, 1
    %s25 = scalar_select %p24, 0, %s23
    %s26 = sadd.s32 1, %s17
    %s27 = scalar_select %p24, %s26, %s17
    %p28 = scmp.ge.s32.totalorder %s27, 2
    %s29 = scalar_select %p28, 0, %s27
    %s30 = ssub.s32 %s17, %s29
    %s31 = ssub.s32 %s18, %s25
    %s32 = sor.u32 %s30, %s31
    %p33 = scmp.eq.s32.totalorder %s32, 0
    %s35 = sadd.s32 %s34, 1
    %s36 = scalar_select %p33, %s34, %s35
    %p39 = pneg %p33
    %p40 = scmp.eq.s32.totalorder %s10, 1
    %p41 = por %p39, %p40
    %p42 = scmp.ne.s32.totalorder %s34, %s37
    %p43 = scmp.eq.s32.totalorder %s10, 0
    %p44 = por %p42, %p43
    %p45 = scmp.ne.s32.totalorder %s34, %s37
    %p46 = scmp.eq.s32.totalorder %s15, 1
    %p47 = por %p45, %p46
    %p48 = scmp.ne.s32.totalorder %s37, %s38
    %p49 = scmp.eq.s32.totalorder %s15, 0
    %p50 = por %p48, %p49
    %p51 = scmp.ne.s32.totalorder %s37, %s38
    %p52 = scmp.eq.s32.totalorder %s16, 1
    %p53 = por %p51, %p52
    %p55 = scmp.ne.s32.totalorder %s38, %s54
    %p56 = scmp.eq.s32.totalorder %s16, 0
    %p57 = por %p55, %p56
    %s59 = sadd.s32 %s58, 1
    %p62 = scmp.eq.s32.totalorder %s10, 1
    %p63 = scmp.ne.s32.totalorder %s58, %s60
    %p64 = scmp.eq.s32.totalorder %s10, 0
    %p65 = por %p63, %p64
    %p66 = scmp.ne.s32.totalorder %s58, %s60
    %p67 = scmp.eq.s32.totalorder %s15, 1
    %p68 = por %p66, %p67
    %p69 = scmp.ne.s32.totalorder %s60, %s61
    %p70 = scmp.eq.s32.totalorder %s15, 0
    %p71 = por %p69, %p70
    %p72 = scmp.ne.s32.totalorder %s60, %s61
    %p73 = scmp.eq.s32.totalorder %s16, 1
    %p74 = por %p72, %p73
    %p76 = scmp.ne.s32.totalorder %s61, %s75
    %p77 = scmp.eq.s32.totalorder %s16, 0
    %p78 = por %p76, %p77
    %s80 = sadd.s32 %s79, 1
    %p83 = scmp.eq.s32.totalorder %s10, 1
    %p84 = scmp.ne.s32.totalorder %s79, %s81
    %p85 = scmp.eq.s32.totalorder %s10, 0
    %p86 = por %p84, %p85
    %p87 = scmp.ne.s32.totalorder %s79, %s81
    %p88 = scmp.eq.s32.totalorder %s15, 1
    %p89 = por %p87, %p88
    %p90 = scmp.ne.s32.totalorder %s81, %s82
    %p91 = scmp.eq.s32.totalorder %s15, 0
    %p92 = por %p90, %p91
    %p93 = scmp.ne.s32.totalorder %s81, %s82
    %p94 = scmp.eq.s32.totalorder %s16, 1
    %p95 = por %p93, %p94
    %p97 = scmp.ne.s32.totalorder %s82, %s96
    %p98 = scmp.eq.s32.totalorder %s16, 0
    %p99 = por %p97, %p98
    %s101 = sadd.s32 %s100, 1
    %p104 = scmp.eq.s32.totalorder %s10, 1
    %p105 = scmp.ne.s32.totalorder %s100, %s102
    %p106 = scmp.eq.s32.totalorder %s10, 0
    %p107 = por %p105, %p106
    %p108 = scmp.ne.s32.totalorder %s100, %s102
    %p109 = scmp.eq.s32.totalorder %s15, 1
    %p110 = por %p108, %p109
    %p111 = scmp.ne.s32.totalorder %s102, %s103
    %p112 = scmp.eq.s32.totalorder %s15, 0
    %p113 = por %p111, %p112
    %p114 = scmp.ne.s32.totalorder %s102, %s103
    %p115 = scmp.eq.s32.totalorder %s16, 1
    %p116 = por %p114, %p115
    %p118 = scmp.ne.s32.totalorder %s103, %s117
    %p119 = scmp.eq.s32.totalorder %s16, 0
    %p120 = por %p118, %p119
    %s121 = ssub.s32 %s17, %s29
    %s122 = ssub.s32 %s18, %s25
    %s123 = sor.u32 %s121, %s122
    %p124 = scmp.eq.s32.totalorder %s123, 0
    %s126 = sadd.s32 %s125, 1
    %s127 = scalar_select %p124, %s125, %s126
    %p130 = pneg %p124
    %p131 = scmp.eq.s32.totalorder %s10, 1
    %p132 = por %p130, %p131
    %p133 = scmp.ne.s32.totalorder %s125, %s128
    %p134 = scmp.eq.s32.totalorder %s10, 0
    %p135 = por %p133, %p134
    %p136 = scmp.ne.s32.totalorder %s125, %s128
    %p137 = scmp.eq.s32.totalorder %s15, 1
    %p138 = por %p136, %p137
    %p139 = scmp.ne.s32.totalorder %s128, %s129
    %p140 = scmp.eq.s32.totalorder %s15, 0
    %p141 = por %p139, %p140
    %p142 = scmp.ne.s32.totalorder %s128, %s129
    %p143 = scmp.eq.s32.totalorder %s16, 1
    %p144 = por %p142, %p143
    %p146 = scmp.ne.s32.totalorder %s129, %s145
    %p147 = scmp.eq.s32.totalorder %s16, 0
    %p148 = por %p146, %p147
    %p149 = scmp.le.s32.totalorder 1, %s10
    %p150 = scmp.lt.s32.totalorder %s10, 3
    %p151 = pnand %p149, %p150
    %p152 = pneg %p151
    // Predicated region
    $region9: #{down_trans_forward.1} parent=5 // pred_check
      _
    $region10: #{down_trans_forward.1} parent=5 // pred_check_branch
      %154 = sbr.rel (%p151) target = $region12
    $region11: #{down_trans_forward.1} parent=5 // pred_region
      %s155 = ssub.s32 %s10, 1
      // Predicated region
      $region13: #{down_trans_forward.1} parent=11 // pred_check
        %p156 = pneg %p71
      $region14: #{down_trans_forward.1} parent=11 // pred_check_branch
        %158 = sbr.rel (%p156) target = $region16
      $region15: #{down_trans_forward.1} parent=11 // pred_region
        _
      $region16: #{down_trans_forward.1} parent=11 // pred_fallthru
        _
      // Predicated region
      $region17: #{down_trans_forward.1} parent=11 // pred_check
        %p159 = pneg %p92
      $region18: #{down_trans_forward.1} parent=11 // pred_check_branch
        %161 = sbr.rel (%p159) target = $region20
      $region19: #{down_trans_forward.1} parent=11 // pred_region
        _
      $region20: #{down_trans_forward.1} parent=11 // pred_fallthru
        _
      // Predicated region
      $region21: #{down_trans_forward.1} parent=11 // pred_check
        %p162 = pneg %p113
      $region22: #{down_trans_forward.1} parent=11 // pred_check_branch
        %164 = sbr.rel (%p162) target = $region24
      $region23: #{down_trans_forward.1} parent=11 // pred_region
        _
      $region24: #{down_trans_forward.1} parent=11 // pred_fallthru
        _
    $region12: #{down_trans_forward.1} parent=5 // pred_fallthru
      _
    %p165 = scmp.lt.s32.totalorder %s10, 2
    // Predicated region
    $region25: #{down_trans_forward.1} parent=5 // pred_check
      %p166 = pneg %p165
    $region26: #{down_trans_forward.1} parent=5 // pred_check_branch
      %168 = sbr.rel (%p166) target = $region28
    $region27: #{down_trans_forward.1} parent=5 // pred_region
      // Predicated region
      $region29: #{down_trans_forward.1} parent=27 // pred_check
        %p169 = pneg %p44
      $region30: #{down_trans_forward.1} parent=27 // pred_check_branch
        %171 = sbr.rel (%p169) target = $region32
      $region31: #{down_trans_forward.1} parent=27 // pred_region
        %p172 = scmp.lt.s32.totalorder %s17, 1
        %s173 = scalar_select %p172, %s17, 1
        %p174 = scmp.lt.s32.totalorder %s18, 0
        %s175 = scalar_select %p174, %s18, 0
        %s176 = smul.addr %s173, 4
        %s177 = sadd.s32 %s175, %s176
        %s178 = smul.addr %s177, 4
        %s179 = scalar_lea.vmem %s0, %s178
      $region32: #{down_trans_forward.1} parent=27 // pred_fallthru
        _
    $region28: #{down_trans_forward.1} parent=5 // pred_fallthru
      _
    %p180 = scmp.le.s32.totalorder 1, %s10
    %p181 = scmp.lt.s32.totalorder %s10, 3
    %p182 = pnand %p180, %p181
    %p183 = pneg %p182
    // Predicated region
    $region33: #{down_trans_forward.1} parent=5 // pred_check
      _
    $region34: #{down_trans_forward.1} parent=5 // pred_check_branch
      %185 = sbr.rel (%p182) target = $region36
    $region35: #{down_trans_forward.1} parent=5 // pred_region
      %s186 = ssub.s32 %s10, 1
      %p187 = scmp.lt.s32.totalorder %s19, 1
      %s188 = scalar_select %p187, %s19, 1
      %p189 = scmp.lt.s32.totalorder %s20, 0
      %s190 = scalar_select %p189, %s20, 0
      %s191 = smul.addr %s188, 4
      %s192 = sadd.s32 %s190, %s191
      %s193 = smul.addr %s192, 4
      %s194 = scalar_lea.vmem %s0, %s193
      %p195 = pneg %p50
      %p196 = pneg %p47
      %p197 = pneg %p71
      %p198 = pneg %p68
      %p199 = pneg %p92
      %p200 = pneg %p89
      %p201 = pneg %p113
      %p202 = pneg %p110
      %p203 = pneg %p141
      %p204 = pneg %p138
      %p205 = scmp.lt.s32.totalorder %s19, 1
      %s206 = scalar_select %p205, %s19, 1
      %p207 = scmp.lt.s32.totalorder %s20, 0
      %s208 = scalar_select %p207, %s20, 0
      %s209 = sadd.s32 %s208, %s206
      %s210 = smul.addr %s209, 8
      %s211 = scalar_lea.vmem %s4, %s210
      %p212 = scmp.lt.s32.totalorder %s19, 1
      %s213 = scalar_select %p212, %s19, 1
      %p214 = scmp.lt.s32.totalorder %s20, 0
      %s215 = scalar_select %p214, %s20, 0
      %s216 = smul.addr %s213, 4
      %s217 = sadd.s32 %s215, %s216
      %s218 = smul.addr %s217, 4
      %s219 = scalar_lea.vmem %s0, %s218
      %p220 = scmp.lt.s32.totalorder %s19, 1
      %s221 = scalar_select %p220, %s19, 1
      %p222 = scmp.lt.s32.totalorder %s20, 0
      %s223 = scalar_select %p222, %s20, 0
      %s224 = sadd.s32 %s223, %s221
      %s225 = smul.addr %s224, 8
      %s226 = scalar_lea.vmem %s4, %s225
      %v228 = vld [vmem:[%s219] sm:$0xf]
      %v229 = vld [vmem:[%s219 + $0x4] sm:$0xf]
      %v230 = vld [vmem:[%s219 + $0x8] sm:$0xf]
      %v231 = vld [vmem:[%s219 + $0xc] sm:$0xf]
      %v232 = vld [vmem:[%s1] sm:$0xf]
      %v233 = vld [vmem:[%s2] sm:$0xff]
      %235 = vset.pattern.permute.xlu0 0
      %236 = vperm.xlu0 %235, %v233
      %v237 = vpop.permute.xlu0 %236
      %v243 = vunpack.c.l.b16 %v228
      %v244 = vunpack.c.l.b16 %v229
      %v245 = vunpack.c.l.b16 %v230
      %v246 = vunpack.c.l.b16 %v231
      %v247 = vpack.c.b16 %v244, %v243
      %v248 = vpack.c.b16 %v246, %v245
      %vm251 = vcmask 261120
      %v253 = vsel %vm251, %v232, 0
      %255 = vmatprep.subr.bf16.mxu0 0
      %256 = vmatpush1.bf16.msra.mxu0 0
      %257 = vmatprep.subr.bf16.mxu0 0
      %258 = vmatpush1.bf16.msra.mxu0 0
      %259 = vmatprep.subr.bf16.mxu0 0
      %260 = vmatpush1.bf16.msra.mxu0 0
      %261 = vmatprep.subr.bf16.mxu0 0
      %262 = vmatpush1.bf16.msra.mxu0 0
      %263 = vmatprep.subr.bf16.mxu0 0
      %264 = vmatpush1.bf16.msra.mxu0 0
      %265 = vmatprep.subr.bf16.mxu0 0
      %266 = vmatpush1.bf16.msra.mxu0 0
      %267 = vmatprep.subr.bf16.mxu0 0
      %268 = vmatpush1.bf16.msra.mxu0 %v248
      %269 = vmatprep.subr.bf16.mxu0 0
      %270 = vmatpush1.bf16.msra.mxu0 %v247
      %271 = vmatprep.subr.bf16.mxu0 0
      %272 = vmatpush2.bf16.msra.mxu0 0
      %273 = vmatprep.subr.bf16.mxu0 0
      %274 = vmatpush2.bf16.msra.mxu0 0
      %275 = vmatprep.subr.bf16.mxu0 0
      %276 = vmatpush2.bf16.msra.mxu0 0
      %277 = vmatprep.subr.bf16.mxu0 0
      %278 = vmatpush2.bf16.msra.mxu0 0
      %279 = vmatprep.subr.bf16.mxu0 0
      %280 = vmatpush2.bf16.msra.mxu0 0
      %281 = vmatprep.subr.bf16.mxu0 0
      %282 = vmatpush2.bf16.msra.mxu0 0
      %283 = vmatprep.subr.bf16.mxu0 0
      %284 = vmatpush2.bf16.msra.mxu0 0
      %285 = vmatprep.subr.bf16.mxu0 0
      %286 = vmatpush2.bf16.msra.mxu0 0
      %287 = vmatprep.mubr.bf16.mxu0 0
      %288 = vmatmul.mubr.bf16.gmra.mxu0 %v253
      %v289 = vpop.f32.mrf.mxu0
      %v290 = vadd.f32 %v237, %v289
      %v291 = vpop.f32.mrf.mxu0
      %v292 = vpop.f32.mrf.mxu0
      %v293 = vpop.f32.mrf.mxu0
      %294 = vdwg.mxu0
      %vm295 = vcmp.ge.f32.partialorder %v290, 0.0
      %v296 = vld [vmem:[%s3] sm:$0xff]
      %298 = vset.pattern.permute.xlu0 0
      %299 = vperm.xlu0 %298, %v296
      %v300 = vpop.permute.xlu0 %299
      %v302 = vmul.f32 %v300, %v290
      %v303 = vsel %vm295, %v290, %v302
      %304 = vst [vmem:[%s226] sm:$0xff] %v303
      %p305 = scmp.lt.s32.totalorder %s19, 1
      %s306 = scalar_select %p305, %s19, 1
      %p307 = scmp.lt.s32.totalorder %s20, 0
      %s308 = scalar_select %p307, %s20, 0
      %s309 = sadd.s32 %s308, %s306
      %s310 = smul.addr %s309, 8
      %s311 = scalar_lea.vmem %s4, %s310
      // Predicated region
      $region37: #{down_trans_forward.1} parent=35 // pred_check
        %p312 = pneg %p138
      $region38: #{down_trans_forward.1} parent=35 // pred_check_branch
        %314 = sbr.rel (%p312) target = $region40
      $region39: #{down_trans_forward.1} parent=35 // pred_region
        _
      $region40: #{down_trans_forward.1} parent=35 // pred_fallthru
        _
    $region36: #{down_trans_forward.1} parent=5 // pred_fallthru
      _
    %p315 = scmp.le.s32.totalorder 2, %s10
    // Predicated region
    $region41: #{down_trans_forward.1} parent=5 // pred_check
      %p316 = pneg %p315
    $region42: #{down_trans_forward.1} parent=5 // pred_check_branch
      %318 = sbr.rel (%p316) target = $region44
    $region43: #{down_trans_forward.1} parent=5 // pred_region
      %s319 = ssub.s32 %s10, 2
      // Predicated region
      $region45: #{down_trans_forward.1} parent=43 // pred_check
        %p320 = pneg %p144
      $region46: #{down_trans_forward.1} parent=43 // pred_check_branch
        %322 = sbr.rel (%p320) target = $region48
      $region47: #{down_trans_forward.1} parent=43 // pred_region
        %p323 = scmp.lt.s32.totalorder %s21, 1
        %s324 = scalar_select %p323, %s21, 1
        %p325 = scmp.lt.s32.totalorder %s22, 0
        %s326 = scalar_select %p325, %s22, 0
        %s327 = sadd.s32 %s326, %s324
        %s328 = smul.addr %s327, 8
        %s329 = scalar_lea.vmem %s4, %s328
      $region48: #{down_trans_forward.1} parent=43 // pred_fallthru
        _
    $region44: #{down_trans_forward.1} parent=5 // pred_fallthru
      _
  $region6: #{down_trans_forward.1} parent=0 // loop_footer
    %s14 = sadd.s32 1, %s10
  $region7: #{down_trans_forward.1} parent=0 // loop_footer_branch
    %9 = sbr.rel target = $region3
  $region8: #{down_trans_forward.1} parent=0 // loop_exit
    _

</llo_original>
